<compile_context>
chip_gen: v7x
topology: tpu7x:2x2x1
jax: 0.10.0
libtpu: 0.0.40
codegen_flags: <defaults>
</compile_context>

<pallas_src>
import functools

import jax
import jax.numpy as jnp
from jax.experimental import pallas as pl
from jax.experimental.pallas import tpu as pltpu

_LANE = 128     # vreg lane width
_SUBLANE = 8    # f32 vreg sublane count


def _round_up(x, m):
    return (x + m - 1) // m * m


# ----------------------------------------------------------------------------
# Kernels
# ----------------------------------------------------------------------------
def _policy_discrete_kernel(x_ref, w1_ref, b1_ref, w2_ref, b2_ref, o_ref):
    # fc1 + ReLU (all f32; K is tiny so the MXU is never the bottleneck).
    h = jnp.maximum(
        jnp.dot(x_ref[...], w1_ref[...], preferred_element_type=jnp.float32)
        + b1_ref[...], 0.0)
    # fc2 (action dim zero-padded to a multiple of 128 lanes at init time).
    logits = jnp.dot(h, w2_ref[...],
                     preferred_element_type=jnp.float32) + b2_ref[...]
    # softmax over dim=0 (matches F.softmax(..., dim=0) in the PyTorch module;
    # it is a cross-batch reduction, so the full batch sits in this block).
    m = jnp.max(logits, axis=0, keepdims=True)
    e = jnp.exp(logits - m)
    o_ref[...] = e / jnp.sum(e, axis=0, keepdims=True)


def _policy_continuous_kernel(x_ref, w1_ref, b1_ref, wh_ref, bh_ref, o_ref, *,
                              a_dim):
    # fc1 + ReLU in f32.
    h = jnp.maximum(
        jnp.dot(x_ref[...], w1_ref[...], preferred_element_type=jnp.float32)
        + b1_ref[...], 0.0)
    # Packed mu|std head: one matmul onto a lane-dense (tb, 128k) slab with
    # mu in cols [0:A] and std in cols [A:2A]; padding cols are don't-care.
    y = jnp.dot(h, wh_ref[...],
                preferred_element_type=jnp.float32) + bh_ref[...]
    # PyTorch softplus (threshold=20): linear above threshold.
    sp = jnp.where(y > 20.0, y, jnp.log1p(jnp.exp(jnp.minimum(y, 20.0))))
    # Keep mu columns linear, std (and padding) columns softplus'd; one
    # unmasked full-width lane-dense store.
    col = jax.lax.broadcasted_iota(jnp.int32, y.shape, dimension=1)
    o_ref[...] = jnp.where(col >= a_dim, sp, y)


# ----------------------------------------------------------------------------
# One-time parameter preparation (hoisted out of the per-call forward path)
# ----------------------------------------------------------------------------
def prepare_discrete_params(w1, b1, w2, b2):
    """Zero-pads the fc2 head to a multiple of 128 lanes. Call once."""
    H, A = w2.shape
    A_pad = _round_up(A, _LANE)
    w2p = jnp.zeros((H, A_pad), jnp.float32).at[:, :A].set(w2.astype(jnp.float32))
    b2p = jnp.zeros((1, A_pad), jnp.float32).at[:, :A].set(
        b2.reshape(1, A).astype(jnp.float32))
    return (w1.astype(jnp.float32), b1.reshape(1, -1).astype(jnp.float32),
            w2p, b2p, A)


def prepare_continuous_params(w1, b1, wmu, bmu, wstd, bstd):
    """Packs mu/std heads into one lane-dense slab: mu cols [0:A], std [A:2A]."""
    H, A = wmu.shape
    W = max(_LANE, _round_up(2 * A, _LANE))
    wh = jnp.zeros((H, W), jnp.float32)
    wh = wh.at[:, :A].set(wmu.astype(jnp.float32))
    wh = wh.at[:, A:2 * A].set(wstd.astype(jnp.float32))
    bh = jnp.zeros((1, W), jnp.float32)
    bh = bh.at[:, :A].set(bmu.reshape(1, A).astype(jnp.float32))
    bh = bh.at[:, A:2 * A].set(bstd.reshape(1, A).astype(jnp.float32))
    return (w1.astype(jnp.float32), b1.reshape(1, -1).astype(jnp.float32),
            wh, bh, A)


# ----------------------------------------------------------------------------
# Forward wrappers (no per-call weight work)
# ----------------------------------------------------------------------------
def policy_forward_discrete(x, w1, b1, w2p, b2p, a_dim):
    """softmax(relu(x @ w1 + b1) @ w2 + b2, dim=0) -> (B, A) probabilities."""
    B, _ = x.shape
    A_pad = w2p.shape[1]
    # The dim=0 softmax couples all batch rows -> single block, no grid.
    out = pl.pallas_call(
        _policy_discrete_kernel,
        out_shape=jax.ShapeDtypeStruct((B, A_pad), jnp.float32),
    )(x.astype(jnp.float32), w1, b1, w2p, b2p)
    return out[:, :a_dim]


def policy_forward_continuous(x, w1, b1, wh, bh, a_dim, *, batch_tile=1024):
    """Returns (mu, std) with std = softplus(...); heads packed in-kernel."""
    B, S = x.shape
    H = w1.shape[1]
    W = wh.shape[1]

    # Large batch_tile amortizes per-grid-step overhead, but cap at ~B/2 so
    # big rollout batches always give >= 2 grid steps (v7x: both TCs busy).
    B8 = _round_up(B, _SUBLANE)
    tb = min(batch_tile, max(_SUBLANE, _round_up(pl.cdiv(B8, 2), _SUBLANE)))
    B_pad = _round_up(B, tb)
    # Skip the pad copy entirely when the tile divides B.
    x = x.astype(jnp.float32)
    xb = x if B_pad == B else jnp.zeros((B_pad, S), jnp.float32).at[:B].set(x)

    out = pl.pallas_call(
        functools.partial(_policy_continuous_kernel, a_dim=a_dim),
        out_shape=jax.ShapeDtypeStruct((B_pad, W), jnp.float32),
        grid=(B_pad // tb,),
        in_specs=[
            pl.BlockSpec((tb, S), lambda i: (i, 0)),
            pl.BlockSpec((S, H), lambda i: (0, 0)),
            pl.BlockSpec((1, H), lambda i: (0, 0)),
            pl.BlockSpec((H, W), lambda i: (0, 0)),
            pl.BlockSpec((1, W), lambda i: (0, 0)),
        ],
        out_specs=pl.BlockSpec((tb, W), lambda i: (i, 0)),
        compiler_params=pltpu.CompilerParams(
            dimension_semantics=("parallel",)),
    )(xb, w1, b1, wh, bh)

    mu = out[:B, :a_dim]
    std = out[:B, a_dim:2 * a_dim]
    return mu, std


# ----------------------------------------------------------------------------
# Pure-JAX references for the sanity check
# ----------------------------------------------------------------------------
def _ref_discrete(x, w1, b1, w2, b2):
    h = jnp.maximum(x @ w1 + b1, 0.0)
    return jax.nn.softmax(h @ w2 + b2, axis=0)


def _ref_continuous(x, w1, b1, wmu, bmu, wstd, bstd):
    h = jnp.maximum(x @ w1 + b1, 0.0)
    return h @ wmu + bmu, jax.nn.softplus(h @ wstd + bstd)


# ----------------------------------------------------------------------------
# Main
# ----------------------------------------------------------------------------
if __name__ == "__main__":
    B, state_dim, hidden_dim, action_dim = 8, 16, 32, 4

    key = jax.random.PRNGKey(0)
    keys = jax.random.split(key, 9)

    def uinit(k, shape, fan_in):
        bound = 1.0 / jnp.sqrt(fan_in)
        return jax.random.uniform(k, shape, jnp.float32, -bound, bound)

    x    = jax.random.normal(keys[0], (B, state_dim), jnp.float32)
    w1   = uinit(keys[1], (state_dim, hidden_dim), state_dim)
    b1   = uinit(keys[2], (1, hidden_dim), state_dim)
    w2   = uinit(keys[3], (hidden_dim, action_dim), hidden_dim)
    b2   = uinit(keys[4], (1, action_dim), hidden_dim)
    wmu  = uinit(keys[5], (hidden_dim, action_dim), hidden_dim)
    bmu  = uinit(keys[6], (1, action_dim), hidden_dim)
    wstd = uinit(keys[7], (hidden_dim, action_dim), hidden_dim)
    bstd = jnp.zeros((1, action_dim), jnp.float32)

    # One-time parameter preparation (pad / pack, outside the forward path).
    dw1, db1, dw2p, db2p, dA = prepare_discrete_params(w1, b1, w2, b2)
    cw1, cb1, cwh, cbh, cA = prepare_continuous_params(
        w1, b1, wmu, bmu, wstd, bstd)

    # Discrete policy (default path of the PyTorch module).
    probs = jax.block_until_ready(
        policy_forward_discrete(x, dw1, db1, dw2p, db2p, dA))
    ref_p = _ref_discrete(x, w1, b1, w2, b2)
    assert jnp.allclose(probs, ref_p, atol=1e-4, rtol=1e-4), "discrete mismatch"
    assert jnp.allclose(jnp.sum(probs, axis=0), 1.0, atol=1e-5), "softmax norm"

    # Continuous policy branch (small batch, single grid step).
    mu, std = policy_forward_continuous(x, cw1, cb1, cwh, cbh, cA)
    mu = jax.block_until_ready(mu)
    std = jax.block_until_ready(std)
    ref_mu, ref_std = _ref_continuous(x, w1, b1, wmu, bmu, wstd, bstd)
    assert jnp.allclose(mu, ref_mu, atol=1e-4, rtol=1e-4), "mu mismatch"
    assert jnp.allclose(std, ref_std, atol=1e-4, rtol=1e-4), "std mismatch"

    # Continuous branch again with a non-tile-aligned batch (exercises the
    # pad path and a multi-step "parallel" grid).
    xl = jax.random.normal(keys[8], (40, state_dim), jnp.float32)
    mu2, std2 = policy_forward_continuous(xl, cw1, cb1, cwh, cbh, cA)
    mu2 = jax.block_until_ready(mu2)
    std2 = jax.block_until_ready(std2)
    ref_mu2, ref_std2 = _ref_continuous(xl, w1, b1, wmu, bmu, wstd, bstd)
    assert jnp.allclose(mu2, ref_mu2, atol=1e-4, rtol=1e-4), "mu (tiled) mismatch"
    assert jnp.allclose(std2, ref_std2, atol=1e-4, rtol=1e-4), "std (tiled) mismatch"

    print("KERNEL_OK")
</pallas_src>

<mosaic_0001>
module attributes {stable_mosaic.version = 11 : i64} {
  func.func @_policy_discrete_kernel(%arg0: memref<8x16xf32, #tpu.memory_space<vmem>>, %arg1: memref<16x32xf32, #tpu.memory_space<vmem>>, %arg2: memref<1x32xf32, #tpu.memory_space<vmem>>, %arg3: memref<32x128xf32, #tpu.memory_space<vmem>>, %arg4: memref<1x128xf32, #tpu.memory_space<vmem>>, %arg5: memref<8x128xf32, #tpu.memory_space<vmem>>) attributes {dimension_semantics = [], scalar_prefetch = 0 : i64, scratch_operands = 0 : i64, tpu.core_type = #tpu.core_type<tc>} {
    %c0 = arith.constant 0 : index
    %c0_0 = arith.constant 0 : index
    %0 = vector.load %arg0[%c0, %c0_0] : memref<8x16xf32, #tpu.memory_space<vmem>>, vector<8x16xf32>
    %c0_1 = arith.constant 0 : index
    %c0_2 = arith.constant 0 : index
    %1 = vector.load %arg1[%c0_1, %c0_2] : memref<16x32xf32, #tpu.memory_space<vmem>>, vector<16x32xf32>
    %cst = arith.constant dense<0.000000e+00> : vector<8x32xf32>
    %2 = tpu.matmul %0, %1, %cst {dimension_numbers = #tpu.dot_dimension_numbers<[1], [0], [0], [1], [0, 0, 1, 1], [], []>} : vector<8x16xf32>, vector<16x32xf32>, vector<8x32xf32> -> vector<8x32xf32>
    %c0_3 = arith.constant 0 : index
    %c0_4 = arith.constant 0 : index
    %3 = vector.load %arg2[%c0_3, %c0_4] : memref<1x32xf32, #tpu.memory_space<vmem>>, vector<1x32xf32>
    %4 = vector.broadcast %3 : vector<1x32xf32> to vector<8x32xf32>
    %5 = arith.addf %2, %4 : vector<8x32xf32>
    %cst_5 = arith.constant 0.000000e+00 : f32
    %6 = vector.broadcast %cst_5 : f32 to vector<8x32xf32>
    %7 = arith.maximumf %5, %6 : vector<8x32xf32>
    %c0_6 = arith.constant 0 : index
    %c0_7 = arith.constant 0 : index
    %8 = vector.load %arg3[%c0_6, %c0_7] : memref<32x128xf32, #tpu.memory_space<vmem>>, vector<32x128xf32>
    %cst_8 = arith.constant dense<0.000000e+00> : vector<8x128xf32>
    %9 = tpu.matmul %7, %8, %cst_8 {dimension_numbers = #tpu.dot_dimension_numbers<[1], [0], [0], [1], [0, 0, 1, 1], [], []>} : vector<8x32xf32>, vector<32x128xf32>, vector<8x128xf32> -> vector<8x128xf32>
    %c0_9 = arith.constant 0 : index
    %c0_10 = arith.constant 0 : index
    %10 = vector.load %arg4[%c0_9, %c0_10] : memref<1x128xf32, #tpu.memory_space<vmem>>, vector<1x128xf32>
    %11 = vector.broadcast %10 : vector<1x128xf32> to vector<8x128xf32>
    %12 = arith.addf %9, %11 : vector<8x128xf32>
    %cst_11 = arith.constant dense<0xFF800000> : vector<128xf32>
    %13 = vector.multi_reduction <maximumf>, %12, %cst_11 [0] : vector<8x128xf32> to vector<128xf32>
    %14 = vector.shape_cast %13 : vector<128xf32> to vector<1x128xf32>
    %15 = vector.broadcast %14 : vector<1x128xf32> to vector<8x128xf32>
    %16 = arith.subf %12, %15 : vector<8x128xf32>
    %17 = math.exp %16 : vector<8x128xf32>
    %cst_12 = arith.constant dense<0.000000e+00> : vector<128xf32>
    %18 = vector.multi_reduction <add>, %17, %cst_12 [0] : vector<8x128xf32> to vector<128xf32>
    %19 = vector.shape_cast %18 : vector<128xf32> to vector<1x128xf32>
    %20 = vector.broadcast %19 : vector<1x128xf32> to vector<8x128xf32>
    %21 = arith.divf %17, %20 : vector<8x128xf32>
    %c0_13 = arith.constant 0 : index
    %c0_14 = arith.constant 0 : index
    %22 = vector.load %arg5[%c0_13, %c0_14] : memref<8x128xf32, #tpu.memory_space<vmem>>, vector<8x128xf32>
    tpu.vector_store %arg5[%c0_13, %c0_14], %21 {strides = array<i32>} : memref<8x128xf32, #tpu.memory_space<vmem>>, vector<8x128xf32>,
    return
  }
}

</mosaic_0001>

<llo_original>
// kernel: tpu_custom_call.1
$region0: #{tpu_custom_call.1}
  #allocation0 [shape = 'u32[]', space=smem, size = 0x4, offset = 0x4, fixed_abs, tag = 'smem constant byte address 0x4 - core index']
  #allocation1 [shape = 'u32[144,128]{1,0:T(1,128)}', space=vmem, size = 0x12000, scoped, tag = 'internal scratch']
  %s0 = inlined_call_operand.hbm [shape: f32[8,16], index: 0, kind: input, shape index: {}]
  %s1 = inlined_call_operand.hbm [shape: f32[16,32], index: 1, kind: input, shape index: {}]
  %s2 = inlined_call_operand.vmem [shape: f32[1,32], index: 2, kind: input, shape index: {}]
  %s3 = inlined_call_operand.hbm [shape: f32[32,128], index: 3, kind: input, shape index: {}]
  %s4 = inlined_call_operand.vmem [shape: f32[1,128], index: 4, kind: input, shape index: {}]
  %s5 = inlined_call_operand.hbm [shape: f32[8,128], index: 5, kind: output, shape index: {}]
  %s6 = sld [smem:[#allocation0]]
  $region42: #{tpu_custom_call.1} parent=0
    _
  %s8 = ssub.s32 1, %s6
  %s9 = scalar_select 0, %s8, %s6
  $region1: #{tpu_custom_call.1} parent=0
    #allocation2 [shape = 'u8[4096]{0}', space=vmem, size = 0x1000, scoped, tag = 'input window, operand 0, single buffered']
    #allocation3 [shape = 's32[1]{0}', space=sflag, size = 0x4, scoped, tag = 'scoped memory for tpu_custom_call.1']
    #allocation4 [shape = 's32[1]{0}', space=sflag, size = 0x4, scoped, tag = 'scoped memory for tpu_custom_call.1']
    #allocation5 [shape = 'u8[8192]{0}', space=vmem, size = 0x2000, scoped, tag = 'input window, operand 1, single buffered']
    #allocation6 [shape = 's32[1]{0}', space=sflag, size = 0x4, scoped, tag = 'scoped memory for tpu_custom_call.1']
    #allocation7 [shape = 'u8[16384]{0}', space=vmem, size = 0x4000, scoped, tag = 'input window, operand 3, single buffered']
    #allocation8 [shape = 'u8[4096]{0}', space=vmem, size = 0x1000, scoped, tag = 'output window, operand 0, single buffered']
    %10 = vsyncpa [#allocation3], 0
    %11 = vsyncpa [#allocation6], 0
    %12 = vsyncpa [#allocation4], 0
    // Predicated region
    $region2: #{tpu_custom_call.1} parent=1 // pred_check
      _
    $region3: #{tpu_custom_call.1} parent=1 // pred_check_branch
      %14 = sbr.rel (0) target = $region5
    $region4: #{tpu_custom_call.1} parent=1 // pred_region
      %s16 = ssub.s32 128, 128
      %17 = vsyncadd [#allocation3], %s16
      %s19 = sshll.u32 [#allocation2], 4
      %s20 = int_to_ptr.vmem [resolvable:$true] %s19
      %22 = dma.hbm_to_vmem [thread:$0]  %s0, 128, %s20, [#allocation3]
    $region5: #{tpu_custom_call.1} parent=1 // pred_fallthru
      _
    // Predicated region
    $region6: #{tpu_custom_call.1} parent=1 // pred_check
      _
    $region7: #{tpu_custom_call.1} parent=1 // pred_check_branch
      %24 = sbr.rel (0) target = $region9
    $region8: #{tpu_custom_call.1} parent=1 // pred_region
      %s26 = ssub.s32 256, 256
      %27 = vsyncadd [#allocation6], %s26
      %s28 = sshll.u32 [#allocation5], 4
      %s29 = int_to_ptr.vmem [resolvable:$true] %s28
      %34 = dma.hbm_to_vmem [thread:$0]  %s1, 256, %s29, [#allocation6], 128, 128, 8
    $region9: #{tpu_custom_call.1} parent=1 // pred_fallthru
      _
    // Predicated region
    $region10: #{tpu_custom_call.1} parent=1 // pred_check
      _
    $region11: #{tpu_custom_call.1} parent=1 // pred_check_branch
      %36 = sbr.rel (0) target = $region13
    $region12: #{tpu_custom_call.1} parent=1 // pred_region
      _
    $region13: #{tpu_custom_call.1} parent=1 // pred_fallthru
      _
    // Predicated region
    $region14: #{tpu_custom_call.1} parent=1 // pred_check
      _
    $region15: #{tpu_custom_call.1} parent=1 // pred_check_branch
      %38 = sbr.rel (0) target = $region17
    $region16: #{tpu_custom_call.1} parent=1 // pred_region
      %s40 = ssub.s32 512, 512
      %41 = vsyncadd [#allocation6], %s40
      %s42 = sshll.u32 [#allocation7], 4
      %s43 = int_to_ptr.vmem [resolvable:$true] %s42
      %48 = dma.hbm_to_vmem [thread:$0]  %s3, 512, %s43, [#allocation6], 128, 128, 8
    $region17: #{tpu_custom_call.1} parent=1 // pred_fallthru
      _
    // Predicated region
    $region18: #{tpu_custom_call.1} parent=1 // pred_check
      _
    $region19: #{tpu_custom_call.1} parent=1 // pred_check_branch
      %50 = sbr.rel (0) target = $region21
    $region20: #{tpu_custom_call.1} parent=1 // pred_region
      _
    $region21: #{tpu_custom_call.1} parent=1 // pred_fallthru
      _
    // Predicated region
    $region22: #{tpu_custom_call.1} parent=1 // pred_check
      _
    $region23: #{tpu_custom_call.1} parent=1 // pred_check_branch
      %52 = sbr.rel (0) target = $region25
    $region24: #{tpu_custom_call.1} parent=1 // pred_region
      %53 = dma.done [#allocation3], 128
    $region25: #{tpu_custom_call.1} parent=1 // pred_fallthru
      _
    // Predicated region
    $region26: #{tpu_custom_call.1} parent=1 // pred_check
      _
    $region27: #{tpu_custom_call.1} parent=1 // pred_check_branch
      %55 = sbr.rel (0) target = $region29
    $region28: #{tpu_custom_call.1} parent=1 // pred_region
      %56 = dma.done [#allocation6], 256
    $region29: #{tpu_custom_call.1} parent=1 // pred_fallthru
      _
    // Predicated region
    $region30: #{tpu_custom_call.1} parent=1 // pred_check
      _
    $region31: #{tpu_custom_call.1} parent=1 // pred_check_branch
      %58 = sbr.rel (0) target = $region33
    $region32: #{tpu_custom_call.1} parent=1 // pred_region
      %59 = dma.done [#allocation6], 512
    $region33: #{tpu_custom_call.1} parent=1 // pred_fallthru
      _
    %v60 = vld [vmem:[#allocation2] sm:$0xff]
    %v61 = vld [vmem:[#allocation5] sm:$0xff]
    %v62 = vld [vmem:[#allocation5 + $0x8] sm:$0xff]
    %v63 = vld [vmem:[%s2] sm:$0x1]
    %v65 = vlaneseq
    %v66 = vshrl.u32 %v65, 7
    %v67 = vsub.s32 0, %v66
    %v68 = vrot.slane %v63, %v67
    %vm70 = vcmask 130048
    %v72 = vsel %vm70, %v60, 0
    %74 = vmatprep.subr.mxu0 0.0
    %75 = vmatpush1.msra.mxu0 %v61
    %76 = vmatprep.subr.mxu0 0.0
    %77 = vmatpush1.msra.mxu0 %v62
    %78 = vmatprep.subr.mxu0 0.0
    %79 = vmatpush1.msra.mxu0 0.0
    %80 = vmatprep.subr.mxu0 0.0
    %81 = vmatpush1.msra.mxu0 0.0
    %82 = vmatprep.subr.mxu0 0.0
    %83 = vmatpush1.msra.mxu0 0.0
    %84 = vmatprep.subr.mxu0 0.0
    %85 = vmatpush1.msra.mxu0 0.0
    %86 = vmatprep.subr.mxu0 0.0
    %87 = vmatpush1.msra.mxu0 0.0
    %88 = vmatprep.subr.mxu0 0.0
    %89 = vmatpush1.msra.mxu0 0.0
    %90 = vmatprep.subr.mxu0 0.0
    %91 = vmatpush1.msra.mxu0 0.0
    %92 = vmatprep.subr.mxu0 0.0
    %93 = vmatpush1.msra.mxu0 0.0
    %94 = vmatprep.subr.mxu0 0.0
    %95 = vmatpush1.msra.mxu0 0.0
    %96 = vmatprep.subr.mxu0 0.0
    %97 = vmatpush1.msra.mxu0 0.0
    %98 = vmatprep.subr.mxu0 0.0
    %99 = vmatpush1.msra.mxu0 0.0
    %100 = vmatprep.subr.mxu0 0.0
    %101 = vmatpush1.msra.mxu0 0.0
    %102 = vmatprep.subr.mxu0 0.0
    %103 = vmatpush1.msra.mxu0 0.0
    %104 = vmatprep.subr.mxu0 0.0
    %105 = vmatpush1.msra.mxu0 0.0
    %106 = vmatprep.subr.mxu0 0.0
    %107 = vmatpush1.msra.mxu0 0.0
    %108 = vmatprep.subr.mxu0 0.0
    %109 = vmatpush1.msra.mxu0 0.0
    %110 = vmatprep.subr.mxu0 0.0
    %111 = vmatpush1.msra.mxu0 0.0
    %112 = vmatprep.subr.mxu0 0.0
    %113 = vmatpush1.msra.mxu0 0.0
    %114 = vmatprep.subr.mxu0 0.0
    %115 = vmatpush1.msra.mxu0 0.0
    %116 = vmatprep.subr.mxu0 0.0
    %117 = vmatpush1.msra.mxu0 0.0
    %118 = vmatprep.subr.mxu0 0.0
    %119 = vmatpush1.msra.mxu0 0.0
    %120 = vmatprep.subr.mxu0 0.0
    %121 = vmatpush1.msra.mxu0 0.0
    %122 = vmatprep.subr.mxu0 0.0
    %123 = vmatpush1.msra.mxu0 0.0
    %124 = vmatprep.subr.mxu0 0.0
    %125 = vmatpush1.msra.mxu0 0.0
    %126 = vmatprep.subr.mxu0 0.0
    %127 = vmatpush1.msra.mxu0 0.0
    %128 = vmatprep.subr.mxu0 0.0
    %129 = vmatpush1.msra.mxu0 0.0
    %130 = vmatprep.subr.mxu0 0.0
    %131 = vmatpush1.msra.mxu0 0.0
    %132 = vmatprep.subr.mxu0 0.0
    %133 = vmatpush1.msra.mxu0 0.0
    %134 = vmatprep.subr.mxu0 0.0
    %135 = vmatpush1.msra.mxu0 0.0
    %136 = vmatprep.subr.mxu0 0.0
    %137 = vmatpush1.msra.mxu0 0.0
    %138 = vmatprep.mubr.f32.mxu0 0.0
    %139 = vmatmul.mubr.f32.gmra.mrb[0].mxu0 %v72
    %v140 = vpop.f32.mrb[0].mxu0
    %v141 = vadd.f32 %v68, %v140
    %v142 = vpop.f32.mrb[0].mxu0
    %143 = vdwg.mxu0
    %v144 = vmax.f32 %v141, 0.0
    %v145 = vld [vmem:[#allocation7] sm:$0xff]
    %v146 = vld [vmem:[#allocation7 + $0x8] sm:$0xff]
    %v147 = vld [vmem:[#allocation7 + $0x10] sm:$0xff]
    %v148 = vld [vmem:[#allocation7 + $0x18] sm:$0xff]
    %v149 = vld [vmem:[%s4] sm:$0x1]
    %v151 = vlaneseq
    %v152 = vshrl.u32 %v151, 7
    %v153 = vsub.s32 0, %v152
    %v154 = vrot.slane %v149, %v153
    %vm156 = vcmask 261120
    %v158 = vsel %vm156, %v144, 0
    %160 = vmatprep.subr.mxu0 0.0
    %161 = vmatpush1.msra.mxu0 %v145
    %162 = vmatprep.subr.mxu0 0.0
    %163 = vmatpush1.msra.mxu0 %v146
    %164 = vmatprep.subr.mxu0 0.0
    %165 = vmatpush1.msra.mxu0 %v147
    %166 = vmatprep.subr.mxu0 0.0
    %167 = vmatpush1.msra.mxu0 %v148
    %168 = vmatprep.subr.mxu0 0.0
    %169 = vmatpush1.msra.mxu0 0.0
    %170 = vmatprep.subr.mxu0 0.0
    %171 = vmatpush1.msra.mxu0 0.0
    %172 = vmatprep.subr.mxu0 0.0
    %173 = vmatpush1.msra.mxu0 0.0
    %174 = vmatprep.subr.mxu0 0.0
    %175 = vmatpush1.msra.mxu0 0.0
    %176 = vmatprep.subr.mxu0 0.0
    %177 = vmatpush1.msra.mxu0 0.0
    %178 = vmatprep.subr.mxu0 0.0
    %179 = vmatpush1.msra.mxu0 0.0
    %180 = vmatprep.subr.mxu0 0.0
    %181 = vmatpush1.msra.mxu0 0.0
    %182 = vmatprep.subr.mxu0 0.0
    %183 = vmatpush1.msra.mxu0 0.0
    %184 = vmatprep.subr.mxu0 0.0
    %185 = vmatpush1.msra.mxu0 0.0
    %186 = vmatprep.subr.mxu0 0.0
    %187 = vmatpush1.msra.mxu0 0.0
    %188 = vmatprep.subr.mxu0 0.0
    %189 = vmatpush1.msra.mxu0 0.0
    %190 = vmatprep.subr.mxu0 0.0
    %191 = vmatpush1.msra.mxu0 0.0
    %192 = vmatprep.subr.mxu0 0.0
    %193 = vmatpush1.msra.mxu0 0.0
    %194 = vmatprep.subr.mxu0 0.0
    %195 = vmatpush1.msra.mxu0 0.0
    %196 = vmatprep.subr.mxu0 0.0
    %197 = vmatpush1.msra.mxu0 0.0
    %198 = vmatprep.subr.mxu0 0.0
    %199 = vmatpush1.msra.mxu0 0.0
    %200 = vmatprep.subr.mxu0 0.0
    %201 = vmatpush1.msra.mxu0 0.0
    %202 = vmatprep.subr.mxu0 0.0
    %203 = vmatpush1.msra.mxu0 0.0
    %204 = vmatprep.subr.mxu0 0.0
    %205 = vmatpush1.msra.mxu0 0.0
    %206 = vmatprep.subr.mxu0 0.0
    %207 = vmatpush1.msra.mxu0 0.0
    %208 = vmatprep.subr.mxu0 0.0
    %209 = vmatpush1.msra.mxu0 0.0
    %210 = vmatprep.subr.mxu0 0.0
    %211 = vmatpush1.msra.mxu0 0.0
    %212 = vmatprep.subr.mxu0 0.0
    %213 = vmatpush1.msra.mxu0 0.0
    %214 = vmatprep.subr.mxu0 0.0
    %215 = vmatpush1.msra.mxu0 0.0
    %216 = vmatprep.subr.mxu0 0.0
    %217 = vmatpush1.msra.mxu0 0.0
    %218 = vmatprep.subr.mxu0 0.0
    %219 = vmatpush1.msra.mxu0 0.0
    %220 = vmatprep.subr.mxu0 0.0
    %221 = vmatpush1.msra.mxu0 0.0
    %222 = vmatprep.subr.mxu0 0.0
    %223 = vmatpush1.msra.mxu0 0.0
    %224 = vmatprep.mubr.f32.mxu0 0.0
    %225 = vmatmul.mubr.f32.gmra.mrb[0].mxu0 %v158
    %v226 = vpop.f32.mrb[0].mxu0
    %v227 = vadd.f32 %v154, %v226
    %v228 = vpop.f32.mrb[0].mxu0
    %229 = vdwg.mxu0
    %v230 = vrot.slane %v227, 4
    %v231 = vmax.f32 %v227, %v230
    %v232 = vrot.slane %v231, 2
    %v233 = vmax.f32 %v231, %v232
    %v234 = vrot.slane %v233, 1
    %v235 = vmax.f32 %v233, %v234
    %v236 = vsub.f32 %v227, %v235
    %v237 = vmul.f32 %v236, 1.442695
    %v238 = vpow.pop %v237
    %v239 = vrot.slane %v238, 4
    %v240 = vadd.f32 %v238, %v239
    %v241 = vrot.slane %v240, 2
    %v242 = vadd.f32 %v240, %v241
    %v243 = vrot.slane %v242, 1
    %v244 = vadd.f32 %v242, %v243
    %v245 = vrcp.pop %v244
    %v246 = vmul.f32 %v238, %v245
    %247 = vst [vmem:[#allocation8] sm:$0xff] %v246
    // Predicated region
    $region34: #{tpu_custom_call.1} parent=1 // pred_check
      _
    $region35: #{tpu_custom_call.1} parent=1 // pred_check_branch
      %249 = sbr.rel (0) target = $region37
    $region36: #{tpu_custom_call.1} parent=1 // pred_region
      %s251 = ssub.s32 128, 128
      %252 = vsyncadd [#allocation4], %s251
      %s254 = sshll.u32 [#allocation8], 4
      %s255 = int_to_ptr.vmem [resolvable:$true] %s254
      %257 = dma.vmem_to_hbm [thread:$0]  %s255, 128, %s5, [#allocation4]
    $region37: #{tpu_custom_call.1} parent=1 // pred_fallthru
      _
    // Predicated region
    $region38: #{tpu_custom_call.1} parent=1 // pred_check
      _
    $region39: #{tpu_custom_call.1} parent=1 // pred_check_branch
      %259 = sbr.rel (0) target = $region41
    $region40: #{tpu_custom_call.1} parent=1 // pred_region
      %260 = dma.done [#allocation4], 128
    $region41: #{tpu_custom_call.1} parent=1 // pred_fallthru
      _
    %261 = vsyncpa [#allocation3], 1
    %262 = vsyncpa [#allocation6], 1
    %263 = vsyncpa [#allocation4], 1

</llo_original>
